<compile_context>
chip_gen: v5e
topology: v5e:2x2
jax: 0.10.0
libtpu: 0.0.40
codegen_flags: <defaults>
</compile_context>

<pallas_src>
import functools

import jax
import jax.numpy as jnp
from jax.experimental import pallas as pl
from jax.experimental.pallas import tpu as pltpu

LANES = 128
ROW_ALIGN = 32                      # block-row alignment safe for f32/bf16/int8
_CHUNK = 8 * LANES                  # pad granularity -> rows always % 8 == 0
_PALLAS_MIN_ELEMENTS = 256 * 1024   # below this, pure jnp beats a kernel launch

_ARBITRARY = getattr(pltpu, "ARBITRARY", "arbitrary")
_CORE_PARALLEL = getattr(pltpu, "CORE_PARALLEL", "parallel")

# dtypes the kernel streams natively (on-chip cast to f32 is free VPU slack)
_NATIVE_DTYPES = tuple(
    jnp.dtype(d) for d in (jnp.float32, jnp.bfloat16, jnp.int8, jnp.uint8,
                           jnp.int32))


def _device_kind():
    try:
        return jax.devices()[0].device_kind.lower()
    except Exception:
        return ""


def _default_block_rows():
    kind = _device_kind()
    if any(tag in kind for tag in ("v2", "v3", "v5 lite", "v5lite", "v5e")):
        return 4096   # 2 inputs x 2 bufs x 2 MiB = 8 MiB <= 16 MiB scoped VMEM
    return 8192       # 2 inputs x 2 bufs x 4 MiB = 16 MiB <= 32 MiB (v6e/v7x)


def _default_splits():
    # v7x: 2 TensorCores per chip, each with its own HBM path -> real core
    # split ~2x aggregate bandwidth for this memory-bound kernel.
    kind = _device_kind()
    if "v7" in kind:
        return 2, _CORE_PARALLEL
    return 1, _ARBITRARY


def _native_or_f32(x):
    if x.dtype == jnp.bool_:
        return x.astype(jnp.int8)   # 1 byte/elem stream; 4x less HBM than f32
    if x.dtype in _NATIVE_DTYPES:
        return x                    # stream as-is, value-cast to f32 on-chip
    return x.astype(jnp.float32)    # f16 / f64 / int64 etc. (rare)


def _iou_loss_jnp(p_flat, t_flat, smooth):
    p = p_flat.astype(jnp.float32)
    t = t_flat.astype(jnp.float32)
    intersection = jnp.sum(p * t)
    total = jnp.sum(p + t)
    union = total - intersection
    return 1.0 - (intersection + smooth) / (union + smooth)


def iou_loss_ref(pred, targets, smooth=1.0):
    return _iou_loss_jnp(pred.reshape(-1), targets.reshape(-1), smooth)


def _iou_partial_kernel(p_ref, t_ref, inter_ref, total_ref, *,
                        block_rows, blocks_per_split, blocks_total,
                        full_blocks, valid_rows, has_phantom):
    i = pl.program_id(1)                       # "arbitrary" reduction axis

    @pl.when(i == 0)
    def _():
        inter_ref[...] = jnp.zeros_like(inter_ref)
        total_ref[...] = jnp.zeros_like(total_ref)

    def _accumulate(p, t):
        # Fold the (block_rows, 128) tile into an (8, 128) vector partial sum:
        # pure vreg-wise VPU adds, no cross-lane reduction in the hot loop.
        inter_ref[0] += (p * t).reshape(-1, 8, LANES).sum(axis=0)
        total_ref[0] += (p + t).reshape(-1, 8, LANES).sum(axis=0)

    p = p_ref[...].astype(jnp.float32)
    t = t_ref[...].astype(jnp.float32)

    if full_blocks == blocks_total and not has_phantom:
        # Every grid step is a fully-valid block: zero masking overhead.
        _accumulate(p, t)
    else:
        block_idx = pl.program_id(0) * blocks_per_split + i
        if full_blocks > 0:
            @pl.when(block_idx < full_blocks)
            def _():
                _accumulate(p, t)                       # unmasked fast path
        if full_blocks < blocks_total:
            # Exactly one ragged tail block pays the iota/compare/select cost.
            @pl.when(block_idx == full_blocks)
            def _():
                rows = full_blocks * block_rows + jax.lax.broadcasted_iota(
                    jnp.int32, (block_rows, LANES), 0)
                valid = rows < valid_rows
                _accumulate(jnp.where(valid, p, 0.0),
                            jnp.where(valid, t, 0.0))
        # Phantom (clamped) blocks: block_idx >= blocks_total -> contribute 0.


def iou_loss(pred, targets, smooth=1.0, *, block_rows=None, num_splits=None,
             use_pallas=None):
    """Computes 1 - IoU over all elements (matches IoULoss.forward)."""
    p = pred.reshape(-1)
    t = targets.reshape(-1)
    n = p.shape[0]
    if n == 0:
        # intersection == union == 0  ->  IoU == smooth / smooth == 1.
        return jnp.float32(0.0)

    if use_pallas is None:
        use_pallas = n >= _PALLAS_MIN_ELEMENTS
    if not use_pallas:
        return _iou_loss_jnp(p, t, smooth)    # tiny-input fast path

    p = _native_or_f32(p)
    t = _native_or_f32(t)

    # Common case (n % 1024 == 0): free reshape to a lane-dense (m, 128) slab,
    # no HBM copy.  Ragged case: pad < 1024 sum-neutral zeros (one copy, only
    # when actually needed; lane alignment cannot be had without it).
    pad = (-n) % _CHUNK
    if pad:
        p = jnp.pad(p, (0, pad))
        t = jnp.pad(t, (0, pad))
    m = (n + pad) // LANES
    p2 = p.reshape(m, LANES)
    t2 = t.reshape(m, LANES)

    if block_rows is None:
        block_rows = _default_block_rows()
    if int(block_rows) >= m:
        br = m                                        # single full block
    else:
        br = max(ROW_ALIGN, (int(block_rows) // ROW_ALIGN) * ROW_ALIGN)

    blocks_total = pl.cdiv(m, br)
    full_blocks = m // br

    if num_splits is None:
        splits, sem0 = _default_splits()
    else:
        splits, sem0 = int(num_splits), _ARBITRARY
    splits = max(1, min(splits, blocks_total))
    if splits == 1:
        sem0 = _ARBITRARY
    blocks_per_split = pl.cdiv(blocks_total, splits)
    has_phantom = splits * blocks_per_split > blocks_total

    if has_phantom:
        def data_map(s, i):
            # Clamp phantom steps onto the previous block index: Pallas skips
            # the re-DMA, and the kernel skips their accumulation.
            return (jnp.minimum(s * blocks_per_split + i, blocks_total - 1), 0)
    else:
        def data_map(s, i):
            return (s * blocks_per_split + i, 0)

    kernel = functools.partial(
        _iou_partial_kernel,
        block_rows=br,
        blocks_per_split=blocks_per_split,
        blocks_total=blocks_total,
        full_blocks=full_blocks,
        valid_rows=m,
        has_phantom=has_phantom,
    )

    inter_parts, total_parts = pl.pallas_call(
        kernel,
        out_shape=(
            jax.ShapeDtypeStruct((splits, 8, LANES), jnp.float32),
            jax.ShapeDtypeStruct((splits, 8, LANES), jnp.float32),
        ),
        grid_spec=pltpu.PrefetchScalarGridSpec(
            num_scalar_prefetch=0,
            grid=(splits, blocks_per_split),
            in_specs=[
                pl.BlockSpec((br, LANES), data_map),
                pl.BlockSpec((br, LANES), data_map),
            ],
            out_specs=(
                pl.BlockSpec((1, 8, LANES), lambda s, i: (s, 0, 0)),
                pl.BlockSpec((1, 8, LANES), lambda s, i: (s, 0, 0)),
            ),
        ),
        compiler_params=pltpu.CompilerParams(
            dimension_semantics=(sem0, _ARBITRARY),
        ),
    )(p2, t2)

    # Tiny final cross-lane reduction + IoU arithmetic outside the kernel.
    intersection = jnp.sum(inter_parts)
    total = jnp.sum(total_parts)
    union = total - intersection
    iou = (intersection + smooth) / (union + smooth)
    return 1.0 - iou


if __name__ == "__main__":
    key = jax.random.PRNGKey(0)
    k1, k2, k3, k4, k5, k6 = jax.random.split(key, 6)

    # 1) Headline NCHW shape from the module spec (segmentation probs / mask),
    #    forced through the Pallas path (single full block).
    pred = jax.nn.sigmoid(jax.random.normal(k1, (2, 4, 16, 16), jnp.float32))
    targets = (jax.random.uniform(k2, (2, 4, 16, 16)) > 0.5).astype(jnp.float32)
    loss = iou_loss(pred, targets, smooth=1.0, use_pallas=True)
    jax.block_until_ready(loss)
    ref = iou_loss_ref(pred, targets, smooth=1.0)
    assert jnp.allclose(loss, ref, rtol=1e-5, atol=1e-5), (loss, ref)

    # 2) Ragged element count -> minimal sum-neutral pad + multi-block grid,
    #    with row masking gated to the single tail block.
    pred2 = jax.nn.sigmoid(jax.random.normal(k3, (2, 4, 33, 33), jnp.float32))
    targets2 = (jax.random.uniform(k4, (2, 4, 33, 33)) > 0.5).astype(jnp.float32)
    loss2 = iou_loss(pred2, targets2, smooth=1.0, use_pallas=True, block_rows=32)
    jax.block_until_ready(loss2)
    ref2 = iou_loss_ref(pred2, targets2, smooth=1.0)
    assert jnp.allclose(loss2, ref2, rtol=1e-5, atol=1e-5), (loss2, ref2)

    # 3) Native bool/int8 mask streaming + forced 2-way split whose second
    #    split carries a phantom (clamped) block.
    pred3 = jax.nn.sigmoid(jax.random.normal(k5, (2, 4, 48, 32), jnp.float32))
    targets3 = jax.random.uniform(k6, (2, 4, 48, 32)) > 0.5   # bool targets
    loss3 = iou_loss(pred3, targets3, smooth=1.0, use_pallas=True,
                     block_rows=32, num_splits=2)
    jax.block_until_ready(loss3)
    ref3 = iou_loss_ref(pred3, targets3.astype(jnp.float32), smooth=1.0)
    assert jnp.allclose(loss3, ref3, rtol=1e-5, atol=1e-5), (loss3, ref3)

    # 4) Tiny input: pure-jnp fast path (no kernel launch).
    loss4 = iou_loss(pred[:1, :1], targets[:1, :1], smooth=1.0)
    jax.block_until_ready(loss4)
    ref4 = iou_loss_ref(pred[:1, :1], targets[:1, :1], smooth=1.0)
    assert jnp.allclose(loss4, ref4, rtol=1e-5, atol=1e-5), (loss4, ref4)

    print("KERNEL_OK")
</pallas_src>

<mosaic_0001>
module attributes {stable_mosaic.version = 11 : i64} {
  func.func @_iou_partial_kernel(%arg0: i32, %arg1: i32, %arg2: memref<16x128xf32, #tpu.memory_space<vmem>>, %arg3: memref<16x128xf32, #tpu.memory_space<vmem>>, %arg4: memref<1x8x128xf32, #tpu.memory_space<vmem>>, %arg5: memref<1x8x128xf32, #tpu.memory_space<vmem>>) attributes {dimension_semantics = [#tpu.dimension_semantics<arbitrary>, #tpu.dimension_semantics<arbitrary>], iteration_bounds = array<i64: 1, 1>, scalar_prefetch = 0 : i64, scratch_operands = 0 : i64, tpu.core_type = #tpu.core_type<tc>, window_params = [{transform_indices = @transform_0, window_bounds = array<i64: 16, 128>}, {transform_indices = @transform_1, window_bounds = array<i64: 16, 128>}, {transform_indices = @transform_2, window_bounds = array<i64: 1, 8, 128>}, {transform_indices = @transform_3, window_bounds = array<i64: 1, 8, 128>}]} {
    %c0_i32 = arith.constant 0 : i32
    %0 = arith.cmpi eq, %arg1, %c0_i32 : i32
    %1 = arith.extui %0 : i1 to i32
    %c0_i32_0 = arith.constant 0 : i32
    %2 = arith.cmpi ne, %1, %c0_i32_0 : i32
    scf.if %2 {
      %cst_17 = arith.constant 0.000000e+00 : f32
      %23 = vector.broadcast %cst_17 : f32 to vector<1x8x128xf32>
      %c0_18 = arith.constant 0 : index
      %c0_19 = arith.constant 0 : index
      %c0_20 = arith.constant 0 : index
      %24 = vector.load %arg4[%c0_18, %c0_19, %c0_20] : memref<1x8x128xf32, #tpu.memory_space<vmem>>, vector<1x8x128xf32>
      tpu.vector_store %arg4[%c0_18, %c0_19, %c0_20], %23 {strides = array<i32>} : memref<1x8x128xf32, #tpu.memory_space<vmem>>, vector<1x8x128xf32>,
      %cst_21 = arith.constant 0.000000e+00 : f32
      %25 = vector.broadcast %cst_21 : f32 to vector<1x8x128xf32>
      %c0_22 = arith.constant 0 : index
      %c0_23 = arith.constant 0 : index
      %c0_24 = arith.constant 0 : index
      %26 = vector.load %arg5[%c0_22, %c0_23, %c0_24] : memref<1x8x128xf32, #tpu.memory_space<vmem>>, vector<1x8x128xf32>
      tpu.vector_store %arg5[%c0_22, %c0_23, %c0_24], %25 {strides = array<i32>} : memref<1x8x128xf32, #tpu.memory_space<vmem>>, vector<1x8x128xf32>,
    } else {
    }
    %c0 = arith.constant 0 : index
    %c0_1 = arith.constant 0 : index
    %3 = vector.load %arg2[%c0, %c0_1] : memref<16x128xf32, #tpu.memory_space<vmem>>, vector<16x128xf32>
    %c0_2 = arith.constant 0 : index
    %c0_3 = arith.constant 0 : index
    %4 = vector.load %arg3[%c0_2, %c0_3] : memref<16x128xf32, #tpu.memory_space<vmem>>, vector<16x128xf32>
    %c0_4 = arith.constant 0 : index
    %c0_5 = arith.constant 0 : index
    %c0_6 = arith.constant 0 : index
    %5 = vector.load %arg4[%c0_4, %c0_5, %c0_6] : memref<1x8x128xf32, #tpu.memory_space<vmem>>, vector<1x8x128xf32>
    %6 = vector.shape_cast %5 : vector<1x8x128xf32> to vector<8x128xf32>
    %7 = arith.mulf %3, %4 : vector<16x128xf32>
    %8 = vector.shape_cast %7 : vector<16x128xf32> to vector<2x8x128xf32>
    %cst = arith.constant dense<0.000000e+00> : vector<8x128xf32>
    %9 = vector.multi_reduction <add>, %8, %cst [0] : vector<2x8x128xf32> to vector<8x128xf32>
    %10 = arith.addf %6, %9 : vector<8x128xf32>
    %c0_7 = arith.constant 0 : index
    %c0_8 = arith.constant 0 : index
    %c0_9 = arith.constant 0 : index
    %11 = vector.load %arg4[%c0_7, %c0_8, %c0_9] : memref<1x8x128xf32, #tpu.memory_space<vmem>>, vector<1x8x128xf32>
    %12 = vector.shape_cast %11 : vector<1x8x128xf32> to vector<8x128xf32>
    %13 = vector.shape_cast %10 : vector<8x128xf32> to vector<1x8x128xf32>
    tpu.vector_store %arg4[%c0_7, %c0_8, %c0_9], %13 {strides = array<i32>} : memref<1x8x128xf32, #tpu.memory_space<vmem>>, vector<1x8x128xf32>,
    %c0_10 = arith.constant 0 : index
    %c0_11 = arith.constant 0 : index
    %c0_12 = arith.constant 0 : index
    %14 = vector.load %arg5[%c0_10, %c0_11, %c0_12] : memref<1x8x128xf32, #tpu.memory_space<vmem>>, vector<1x8x128xf32>
    %15 = vector.shape_cast %14 : vector<1x8x128xf32> to vector<8x128xf32>
    %16 = arith.addf %3, %4 : vector<16x128xf32>
    %17 = vector.shape_cast %16 : vector<16x128xf32> to vector<2x8x128xf32>
    %cst_13 = arith.constant dense<0.000000e+00> : vector<8x128xf32>
    %18 = vector.multi_reduction <add>, %17, %cst_13 [0] : vector<2x8x128xf32> to vector<8x128xf32>
    %19 = arith.addf %15, %18 : vector<8x128xf32>
    %c0_14 = arith.constant 0 : index
    %c0_15 = arith.constant 0 : index
    %c0_16 = arith.constant 0 : index
    %20 = vector.load %arg5[%c0_14, %c0_15, %c0_16] : memref<1x8x128xf32, #tpu.memory_space<vmem>>, vector<1x8x128xf32>
    %21 = vector.shape_cast %20 : vector<1x8x128xf32> to vector<8x128xf32>
    %22 = vector.shape_cast %19 : vector<8x128xf32> to vector<1x8x128xf32>
    tpu.vector_store %arg5[%c0_14, %c0_15, %c0_16], %22 {strides = array<i32>} : memref<1x8x128xf32, #tpu.memory_space<vmem>>, vector<1x8x128xf32>,
    return
  }
  func.func @transform_0(%arg0: i32, %arg1: i32) -> (i32, i32) {
    %c1_i32 = arith.constant 1 : i32
    %0 = arith.muli %arg0, %c1_i32 : i32
    %1 = arith.addi %0, %arg1 : i32
    %c0_i32 = arith.constant 0 : i32
    %c0_i32_0 = arith.constant 0 : i32
    return %1, %c0_i32 : i32, i32
  }
  func.func @transform_1(%arg0: i32, %arg1: i32) -> (i32, i32) {
    %c1_i32 = arith.constant 1 : i32
    %0 = arith.muli %arg0, %c1_i32 : i32
    %1 = arith.addi %0, %arg1 : i32
    %c0_i32 = arith.constant 0 : i32
    %c0_i32_0 = arith.constant 0 : i32
    return %1, %c0_i32 : i32, i32
  }
  func.func @transform_2(%arg0: i32, %arg1: i32) -> (i32, i32, i32) {
    %c0_i32 = arith.constant 0 : i32
    %c0_i32_0 = arith.constant 0 : i32
    %c0_i32_1 = arith.constant 0 : i32
    return %arg0, %c0_i32, %c0_i32_0 : i32, i32, i32
  }
  func.func @transform_3(%arg0: i32, %arg1: i32) -> (i32, i32, i32) {
    %c0_i32 = arith.constant 0 : i32
    %c0_i32_0 = arith.constant 0 : i32
    %c0_i32_1 = arith.constant 0 : i32
    return %arg0, %c0_i32, %c0_i32_0 : i32, i32, i32
  }
}

</mosaic_0001>

<llo_original>
// kernel: tpu_custom_call.1
$region0: #{tpu_custom_call.1}
  #allocation0 [shape = 'u32[]', space=smem, size = 0x4, offset = 0x4, fixed_abs, tag = 'smem constant byte address 0x4 - core index']
  #allocation1 [shape = 'u32[72,128]{1,0:T(1,128)}', space=vmem, size = 0x9000, scoped, tag = 'internal scratch']
  %s0 = inlined_call_operand.hbm [shape: f32[16,128], index: 0, kind: input, shape index: {}]
  %s1 = inlined_call_operand.hbm [shape: f32[16,128], index: 1, kind: input, shape index: {}]
  %s2 = inlined_call_operand.hbm [shape: f32[1,8,128], index: 2, kind: output, shape index: {0}]
  %s3 = inlined_call_operand.hbm [shape: f32[1,8,128], index: 3, kind: output, shape index: {1}]
  %4 = xla_tuple %s2, %s3
  %s5 = sld [smem:[#allocation0]]
  $region38: #{tpu_custom_call.1} parent=0
    _
  %s7 = ssub.s32 1, %s5
  %s8 = scalar_select 0, %s7, %s5
  $region1: #{tpu_custom_call.1} parent=0
    #allocation2 [shape = 'u8[8192]{0}', space=vmem, size = 0x2000, scoped, tag = 'input window, operand 0, single buffered']
    #allocation3 [shape = 's32[1]{0}', space=sflag, size = 0x4, scoped, tag = 'scoped memory for tpu_custom_call.1']
    #allocation4 [shape = 's32[1]{0}', space=sflag, size = 0x4, scoped, tag = 'scoped memory for tpu_custom_call.1']
    #allocation5 [shape = 'u8[8192]{0}', space=vmem, size = 0x2000, scoped, tag = 'input window, operand 1, single buffered']
    #allocation6 [shape = 's32[1]{0}', space=sflag, size = 0x4, scoped, tag = 'scoped memory for tpu_custom_call.1']
    #allocation7 [shape = 'u8[4096]{0}', space=vmem, size = 0x1000, scoped, tag = 'output window, operand 0, single buffered']
    #allocation8 [shape = 'u8[4096]{0}', space=vmem, size = 0x1000, scoped, tag = 'output window, operand 1, single buffered']
    #allocation9 [shape = 's32[1]{0}', space=sflag, size = 0x4, scoped, tag = 'scoped memory for tpu_custom_call.1']
    %9 = vsyncpa [#allocation3], 0
    %10 = vsyncpa [#allocation6], 0
    %11 = vsyncpa [#allocation4], 0
    %12 = vsyncpa [#allocation9], 0
    // Predicated region
    $region2: #{tpu_custom_call.1} parent=1 // pred_check
      _
    $region3: #{tpu_custom_call.1} parent=1 // pred_check_branch
      %14 = sbr.rel (0) target = $region5
    $region4: #{tpu_custom_call.1} parent=1 // pred_region
      %s15 = sadd.s32 0, 0
      %s16 = smul.u32 2, %s15
      %18 = vsyncadd [#allocation3], 0
      %s19 = smul.addr %s16, 8
      %s20 = scalar_lea.hbm %s0, %s19
      %s21 = sshll.u32 %s20, 4
      %s22 = int_to_ptr.hbm [resolvable:$true] %s21
      %s23 = sshll.u32 [#allocation2], 4
      %s24 = int_to_ptr.vmem [resolvable:$true] %s23
      %29 = dma.hbm_to_vmem [thread:$0]  %s22, 256, %s24, [#allocation3], 128, 128, 8
    $region5: #{tpu_custom_call.1} parent=1 // pred_fallthru
      _
    // Predicated region
    $region6: #{tpu_custom_call.1} parent=1 // pred_check
      _
    $region7: #{tpu_custom_call.1} parent=1 // pred_check_branch
      %31 = sbr.rel (0) target = $region9
    $region8: #{tpu_custom_call.1} parent=1 // pred_region
      %s32 = sadd.s32 0, 0
      %s33 = smul.u32 2, %s32
      %35 = vsyncadd [#allocation6], 0
      %s36 = smul.addr %s33, 8
      %s37 = scalar_lea.hbm %s1, %s36
      %s38 = sshll.u32 %s37, 4
      %s39 = int_to_ptr.hbm [resolvable:$true] %s38
      %s40 = sshll.u32 [#allocation5], 4
      %s41 = int_to_ptr.vmem [resolvable:$true] %s40
      %46 = dma.hbm_to_vmem [thread:$0]  %s39, 256, %s41, [#allocation6], 128, 128, 8
    $region9: #{tpu_custom_call.1} parent=1 // pred_fallthru
      _
    // Predicated region
    $region10: #{tpu_custom_call.1} parent=1 // pred_check
      _
    $region11: #{tpu_custom_call.1} parent=1 // pred_check_branch
      %48 = sbr.rel (0) target = $region13
    $region12: #{tpu_custom_call.1} parent=1 // pred_region
      %50 = dma.done [#allocation3], 256
    $region13: #{tpu_custom_call.1} parent=1 // pred_fallthru
      _
    // Predicated region
    $region14: #{tpu_custom_call.1} parent=1 // pred_check
      _
    $region15: #{tpu_custom_call.1} parent=1 // pred_check_branch
      %52 = sbr.rel (0) target = $region17
    $region16: #{tpu_custom_call.1} parent=1 // pred_region
      %54 = dma.done [#allocation6], 256
    $region17: #{tpu_custom_call.1} parent=1 // pred_fallthru
      _
    %s55 = sadd.s32 0, 0
    %s56 = smul.u32 2, %s55
    %s57 = sadd.s32 0, 0
    %s58 = smul.u32 2, %s57
    %p59 = scmp.eq.s32.totalorder 0, 0
    // Predicated region
    $region18: #{tpu_custom_call.1} parent=1 // pred_check
      %p60 = pneg %p59
    $region19: #{tpu_custom_call.1} parent=1 // pred_check_branch
      %62 = sbr.rel (%p60) target = $region21
    $region20: #{tpu_custom_call.1} parent=1 // pred_region
      %63 = vst [vmem:[#allocation7] sm:$0xff] 0.0
      %64 = vst [vmem:[#allocation8] sm:$0xff] 0.0
    $region21: #{tpu_custom_call.1} parent=1 // pred_fallthru
      _
    %v65 = vld [vmem:[#allocation2] sm:$0xff]
    %v66 = vld [vmem:[#allocation2 + $0x8] sm:$0xff]
    %v67 = vld [vmem:[#allocation5] sm:$0xff]
    %v68 = vld [vmem:[#allocation5 + $0x8] sm:$0xff]
    %v69 = vld [vmem:[#allocation7] sm:$0xff]
    %v70 = vmul.f32 %v65, %v67
    %v71 = vmul.f32 %v66, %v68
    %v72 = vadd.f32 %v70, %v71
    %v73 = vadd.f32 %v69, %v72
    %74 = vst [vmem:[#allocation7] sm:$0xff] %v73
    %v75 = vld [vmem:[#allocation8] sm:$0xff]
    %v76 = vadd.f32 %v65, %v67
    %v77 = vadd.f32 %v66, %v68
    %v78 = vadd.f32 %v76, %v77
    %v79 = vadd.f32 %v75, %v78
    %80 = vst [vmem:[#allocation8] sm:$0xff] %v79
    // Predicated region
    $region22: #{tpu_custom_call.1} parent=1 // pred_check
      _
    $region23: #{tpu_custom_call.1} parent=1 // pred_check_branch
      %82 = sbr.rel (0) target = $region25
    $region24: #{tpu_custom_call.1} parent=1 // pred_region
      %84 = vsyncadd [#allocation4], 0
      %s86 = sshll.u32 [#allocation7], 4
      %s87 = int_to_ptr.vmem [resolvable:$true] %s86
      %s88 = sshll.u32 %s2, 4
      %s89 = int_to_ptr.hbm [resolvable:$true] %s88
      %91 = dma.vmem_to_hbm [thread:$0]  %s87, 128, %s89, [#allocation4]
    $region25: #{tpu_custom_call.1} parent=1 // pred_fallthru
      _
    // Predicated region
    $region26: #{tpu_custom_call.1} parent=1 // pred_check
      _
    $region27: #{tpu_custom_call.1} parent=1 // pred_check_branch
      %93 = sbr.rel (0) target = $region29
    $region28: #{tpu_custom_call.1} parent=1 // pred_region
      %95 = vsyncadd [#allocation9], 0
      %s97 = sshll.u32 [#allocation8], 4
      %s98 = int_to_ptr.vmem [resolvable:$true] %s97
      %s99 = sshll.u32 %s3, 4
      %s100 = int_to_ptr.hbm [resolvable:$true] %s99
      %102 = dma.vmem_to_hbm [thread:$0]  %s98, 128, %s100, [#allocation9]
    $region29: #{tpu_custom_call.1} parent=1 // pred_fallthru
      _
    // Predicated region
    $region30: #{tpu_custom_call.1} parent=1 // pred_check
      _
    $region31: #{tpu_custom_call.1} parent=1 // pred_check_branch
      %104 = sbr.rel (0) target = $region33
    $region32: #{tpu_custom_call.1} parent=1 // pred_region
      %106 = dma.done [#allocation4], 128
    $region33: #{tpu_custom_call.1} parent=1 // pred_fallthru
      _
    // Predicated region
    $region34: #{tpu_custom_call.1} parent=1 // pred_check
      _
    $region35: #{tpu_custom_call.1} parent=1 // pred_check_branch
      %108 = sbr.rel (0) target = $region37
    $region36: #{tpu_custom_call.1} parent=1 // pred_region
      %110 = dma.done [#allocation9], 128
    $region37: #{tpu_custom_call.1} parent=1 // pred_fallthru
      _
    %111 = vsyncpa [#allocation3], 1
    %112 = vsyncpa [#allocation6], 1
    %113 = vsyncpa [#allocation4], 1
    %114 = vsyncpa [#allocation9], 1

</llo_original>
